<compile_context>
chip_gen: v7x
topology: tpu7x:2x2x1
jax: 0.10.0
libtpu: 0.0.40
codegen_flags: <defaults>
</compile_context>

<pallas_src>
import functools
import math

import jax
import jax.numpy as jnp
from jax import lax
from jax.experimental import pallas as pl
from jax.experimental.pallas import tpu as pltpu

EPS = 1e-6


# ---------------- in-kernel math helpers ----------------
def _layer_norm(v, a, b, eps=EPS):
    # torch: mean over last dim, unbiased std (ddof=1), normalize by (std + eps)
    d = v.shape[-1]
    mean = jnp.mean(v, axis=-1, keepdims=True)
    var = jnp.sum((v - mean) ** 2, axis=-1, keepdims=True) * (1.0 / (d - 1))
    std = jnp.sqrt(var)
    inv = pl.reciprocal(std + eps, approx=False)   # exact: one value per row
    return a * ((v - mean) * inv) + b


def _softmax(s):
    m = jnp.max(s, axis=-1, keepdims=True)
    e = jnp.exp(s - m)
    denom = jnp.sum(e, axis=-1, keepdims=True)
    return e * pl.reciprocal(denom, approx=True)   # EUP slot, not a VALU divide


# ---------------- kernel 1: LN1 + fused QKV projection ----------------
def ln_qkv_kernel(x_ref, ln_a_ref, ln_b_ref, wqkv_ref, bqkv_ref, qkv_ref):
    xf = x_ref[...].astype(jnp.float32)                       # (rt, D)
    y = _layer_norm(xf, ln_a_ref[...], ln_b_ref[...])         # f32 statistics
    qkv = jnp.dot(y.astype(wqkv_ref.dtype), wqkv_ref[...],
                  preferred_element_type=jnp.float32) + bqkv_ref[...]
    qkv_ref[...] = qkv.astype(qkv_ref.dtype)                  # (rt, 3D) bf16


# ---------------- kernel 2: attention + residual + LN2 + FFN + residual ----------
def attn_ffn_kernel(x_ref, qkv_ref, mask_ref,
                    wo_ref, bo_ref, w1_ref, b1_ref, w2_ref, b2_ref,
                    ln2a_ref, ln2b_ref, out_ref, *, num_heads):
    q_tile = x_ref.shape[1]
    D = x_ref.shape[2]
    dk = D // num_heads
    scale = 1.0 / math.sqrt(dk)

    qi = pl.program_id(1)
    q0 = pl.multiple_of(qi * q_tile, q_tile)

    # additive key-mask bias: computed once, reused by every head (add, not select)
    m = mask_ref[0]                                           # (1, S)
    mask_bias = jnp.where(m == 0.0, -1e9, 0.0).astype(jnp.float32)

    head_outs = []
    for h in range(num_heads):
        lo = h * dk
        # slice the fused-QKV ref directly: only the dk lanes each head uses
        q_h = qkv_ref[0, pl.ds(q0, q_tile), lo:lo + dk]               # (TQ, dk)
        k_h = qkv_ref[0, :, D + lo:D + lo + dk]                       # (S,  dk)
        v_h = qkv_ref[0, :, 2 * D + lo:2 * D + lo + dk]               # (S,  dk)
        # contract last dims of Q and K directly -- no explicit transpose
        s = lax.dot_general(q_h, k_h, (((1,), (1,)), ((), ())),
                            preferred_element_type=jnp.float32) * scale
        s = s + mask_bias                                             # (TQ, S) f32
        p = _softmax(s)
        o_h = jnp.dot(p.astype(v_h.dtype), v_h,                       # bf16 LHS
                      preferred_element_type=jnp.float32)             # (TQ, dk)
        head_outs.append(o_h.astype(wo_ref.dtype))

    # lane-dense concatenation of head outputs -> one full-width (K = D) projection
    attn_in = jnp.concatenate(head_outs, axis=-1)                     # (TQ, D) bf16
    attn = jnp.dot(attn_in, wo_ref[...],
                   preferred_element_type=jnp.float32) + bo_ref[...]

    x_q = x_ref[0].astype(jnp.float32)                                # residual (f32)
    x1 = x_q + attn                                                   # dropout = id

    # ----- sublayer 1: feed-forward -----
    y2 = _layer_norm(x1, ln2a_ref[...], ln2b_ref[...])
    h1 = jnp.dot(y2.astype(w1_ref.dtype), w1_ref[...],
                 preferred_element_type=jnp.float32) + b1_ref[...]
    h1 = jnp.maximum(h1, 0.0)
    ff = jnp.dot(h1.astype(w2_ref.dtype), w2_ref[...],
                 preferred_element_type=jnp.float32) + b2_ref[...]

    out_ref[0] = (x1 + ff).astype(out_ref.dtype)


# ---------------- wrapper ----------------
def _default_vmem_limit():
    cap = 64 * 1024 * 1024
    try:
        info = pltpu.get_tpu_info()
        cap = int(getattr(info, "vmem_capacity_bytes", cap))
    except Exception:
        pass
    # ~85% of physical VMEM, never above 110 MiB (v5e/v6e: ~109 MiB, v7x: ~54 MiB)
    return max(32 * 1024 * 1024, min(int(cap * 0.85), 110 * 1024 * 1024))


def _encoder_layer_impl(x, mask, params, *, num_heads, q_tile, compute_dtype,
                        vmem_limit_bytes, single_buffer_weights):
    B, S, D = x.shape
    assert D % num_heads == 0, "hidden dim must be divisible by num_heads"
    F = params["w1"].shape[1]
    f32 = jnp.float32

    if vmem_limit_bytes is None:
        vmem_limit_bytes = _default_vmem_limit()

    # q tile: cap at 256 (>= MXU dim buys nothing, just inflates (TQ,S) temps)
    if q_tile is None:
        q_tile = S
        for t in (256, 128, 64, 32, 16, 8):
            if t <= S and S % t == 0:
                q_tile = t
                break
    assert S % q_tile == 0
    nq = S // q_tile

    if single_buffer_weights:
        def const_spec(shape):
            # constant-index blocks: single buffer (their block never changes)
            return pl.BlockSpec(shape, lambda *_: (0,) * len(shape),
                                pipeline_mode=pl.Buffered(1))
    else:
        def const_spec(shape):
            return pl.BlockSpec(shape, lambda *_: (0,) * len(shape))

    cparams = lambda sem: pltpu.CompilerParams(
        dimension_semantics=sem, vmem_limit_bytes=vmem_limit_bytes)
    cast = lambda w: w.astype(compute_dtype)

    # fuse Q/K/V projection weights -> one MXU op with N = 3D
    wqkv = cast(jnp.concatenate([params["wq"], params["wk"], params["wv"]], axis=1))
    bqkv = jnp.concatenate([params["bq"], params["bk"], params["bv"]],
                           axis=1).astype(f32)

    # ---- stage 1: LN1 + fused QKV projection over flattened (B*S, D) rows ----
    rows = B * S
    rt = rows
    for t in (512, 256, 128, 64, 32, 16, 8):
        if t <= rows and rows % t == 0:
            rt = t
            break
    x2d = x.reshape(rows, D)
    qkv2d = pl.pallas_call(
        ln_qkv_kernel,
        out_shape=jax.ShapeDtypeStruct((rows, 3 * D), compute_dtype),
        grid=(rows // rt,),
        in_specs=[
            pl.BlockSpec((rt, D), lambda i: (i, 0)),
            const_spec((1, D)), const_spec((1, D)),       # ln1 a, b
            const_spec((D, 3 * D)), const_spec((1, 3 * D)),
        ],
        out_specs=pl.BlockSpec((rt, 3 * D), lambda i: (i, 0)),
        compiler_params=cparams(("parallel",)),
    )(x2d, params["ln1_a"].astype(f32), params["ln1_b"].astype(f32), wqkv, bqkv)
    qkv = qkv2d.reshape(B, S, 3 * D)

    # ---- stage 2: attention + residual + LN2 + FFN + residual ----
    kernel = functools.partial(attn_ffn_kernel, num_heads=num_heads)
    return pl.pallas_call(
        kernel,
        out_shape=jax.ShapeDtypeStruct((B, S, D), x.dtype),
        grid=(B, nq),
        in_specs=[
            pl.BlockSpec((1, q_tile, D), lambda b, q: (b, q, 0)),   # x (q tile)
            pl.BlockSpec((1, S, 3 * D), lambda b, q: (b, 0, 0)),    # fused qkv
            pl.BlockSpec((1, 1, S), lambda b, q: (b, 0, 0)),        # mask
            const_spec((D, D)), const_spec((1, D)),                 # wo, bo
            const_spec((D, F)), const_spec((1, F)),                 # w1, b1
            const_spec((F, D)), const_spec((1, D)),                 # w2, b2
            const_spec((1, D)), const_spec((1, D)),                 # ln2 a, b
        ],
        out_specs=pl.BlockSpec((1, q_tile, D), lambda b, q: (b, q, 0)),
        compiler_params=cparams(("parallel", "parallel")),          # no scratch carry
    )(x, qkv, mask,
      cast(params["wo"]), params["bo"].astype(f32),
      cast(params["w1"]), params["b1"].astype(f32),
      cast(params["w2"]), params["b2"].astype(f32),
      params["ln2_a"].astype(f32), params["ln2_b"].astype(f32))


def encoder_layer(x, mask, params, *, num_heads, q_tile=None,
                  compute_dtype=jnp.bfloat16, vmem_limit_bytes=None):
    try:
        return _encoder_layer_impl(x, mask, params, num_heads=num_heads,
                                   q_tile=q_tile, compute_dtype=compute_dtype,
                                   vmem_limit_bytes=vmem_limit_bytes,
                                   single_buffer_weights=True)
    except Exception:
        # Fallback if pipeline_mode=pl.Buffered(1) is not supported by this
        # jax version; genuine errors will re-raise from this path.
        return _encoder_layer_impl(x, mask, params, num_heads=num_heads,
                                   q_tile=q_tile, compute_dtype=compute_dtype,
                                   vmem_limit_bytes=vmem_limit_bytes,
                                   single_buffer_weights=False)


# ---------------- pure-JAX reference (f32, torch semantics) ----------------
def _layer_norm_ref(v, a, b, eps=EPS):
    d = v.shape[-1]
    mean = jnp.mean(v, axis=-1, keepdims=True)
    var = jnp.sum((v - mean) ** 2, axis=-1, keepdims=True) / (d - 1)
    std = jnp.sqrt(var)
    return a * ((v - mean) / (std + eps)) + b


def encoder_layer_ref(x, mask, p, *, num_heads):
    B, S, D = x.shape
    dk = D // num_heads

    y = _layer_norm_ref(x, p["ln1_a"][0], p["ln1_b"][0])
    q = y @ p["wq"] + p["bq"][0]
    k = y @ p["wk"] + p["bk"][0]
    v = y @ p["wv"] + p["bv"][0]
    q = q.reshape(B, S, num_heads, dk).transpose(0, 2, 1, 3)
    k = k.reshape(B, S, num_heads, dk).transpose(0, 2, 1, 3)
    v = v.reshape(B, S, num_heads, dk).transpose(0, 2, 1, 3)
    scores = jnp.einsum("bhqd,bhkd->bhqk", q, k) / math.sqrt(dk)
    key_mask = (mask[:, None, :, :] == 0.0)                    # (B,1,1,S)
    scores = jnp.where(key_mask, -1e9, scores)
    pattn = jax.nn.softmax(scores, axis=-1)
    o = jnp.einsum("bhqk,bhkd->bhqd", pattn, v).transpose(0, 2, 1, 3).reshape(B, S, D)
    attn = o @ p["wo"] + p["bo"][0]
    x1 = x + attn
    y2 = _layer_norm_ref(x1, p["ln2_a"][0], p["ln2_b"][0])
    ff = jnp.maximum(y2 @ p["w1"] + p["b1"][0], 0.0) @ p["w2"] + p["b2"][0]
    return x1 + ff


def make_params(key, D, F):
    ks = jax.random.split(key, 8)
    s = 1.0 / math.sqrt(D)
    sf = 1.0 / math.sqrt(F)
    return {
        "wq": jax.random.normal(ks[0], (D, D), jnp.float32) * s,
        "bq": jnp.zeros((1, D), jnp.float32),
        "wk": jax.random.normal(ks[1], (D, D), jnp.float32) * s,
        "bk": jnp.zeros((1, D), jnp.float32),
        "wv": jax.random.normal(ks[2], (D, D), jnp.float32) * s,
        "bv": jnp.zeros((1, D), jnp.float32),
        "wo": jax.random.normal(ks[3], (D, D), jnp.float32) * s,
        "bo": jax.random.normal(ks[4], (1, D), jnp.float32) * 0.01,
        "w1": jax.random.normal(ks[5], (D, F), jnp.float32) * s,
        "b1": jax.random.normal(ks[6], (1, F), jnp.float32) * 0.01,
        "w2": jax.random.normal(ks[7], (F, D), jnp.float32) * sf,
        "b2": jnp.zeros((1, D), jnp.float32),
        "ln1_a": jnp.ones((1, D), jnp.float32),
        "ln1_b": jnp.zeros((1, D), jnp.float32),
        "ln2_a": jnp.ones((1, D), jnp.float32),
        "ln2_b": jnp.zeros((1, D), jnp.float32),
    }


if __name__ == "__main__":
    B, S, D, H, F = 2, 8, 32, 4, 64

    key = jax.random.PRNGKey(0)
    kx, kp = jax.random.split(key)
    x = jax.random.normal(kx, (B, S, D), jnp.float32)
    # mask: first batch fully visible, second batch masks out last 2 key positions
    mask = jnp.ones((B, 1, S), jnp.float32)
    mask = mask.at[1, 0, S - 2:].set(0.0)

    params = make_params(kp, D, F)
    ref = encoder_layer_ref(x, mask, params, num_heads=H)

    # 1) full-precision path: tight check of the kernel semantics
    out_f32 = jax.block_until_ready(
        encoder_layer(x, mask, params, num_heads=H, compute_dtype=jnp.float32))
    assert out_f32.shape == (B, S, D)
    err_f32 = float(jnp.max(jnp.abs(out_f32 - ref)))
    assert jnp.allclose(out_f32, ref, rtol=5e-3, atol=5e-3), err_f32

    # 2) performance path (bf16 matmul operands, f32 accumulation): looser check
    out_bf = jax.block_until_ready(encoder_layer(x, mask, params, num_heads=H))
    assert out_bf.shape == (B, S, D)
    err_bf = float(jnp.max(jnp.abs(out_bf.astype(jnp.float32) - ref)))
    assert jnp.allclose(out_bf.astype(jnp.float32), ref, rtol=1e-1, atol=1e-1), err_bf

    print("KERNEL_OK")
</pallas_src>

<mosaic_0001>
module attributes {stable_mosaic.version = 11 : i64} {
  func.func @ln_qkv_kernel(%arg0: i32, %arg1: memref<16x32xf32, #tpu.memory_space<vmem>>, %arg2: memref<1x32xf32, #tpu.memory_space<vmem>>, %arg3: memref<1x32xf32, #tpu.memory_space<vmem>>, %arg4: memref<32x96xf32, #tpu.memory_space<vmem>>, %arg5: memref<1x96xf32, #tpu.memory_space<vmem>>, %arg6: memref<16x96xf32, #tpu.memory_space<vmem>>) attributes {dimension_semantics = [#tpu.dimension_semantics<parallel>], iteration_bounds = array<i64: 1>, scalar_prefetch = 0 : i64, scratch_operands = 0 : i64, tpu.core_type = #tpu.core_type<tc>, window_params = [{transform_indices = @transform_0, window_bounds = array<i64: 16, 32>}, {pipeline_mode = #tpu.pipeline_mode<synchronous>, transform_indices = @transform_1, window_bounds = array<i64: 1, 32>}, {pipeline_mode = #tpu.pipeline_mode<synchronous>, transform_indices = @transform_2, window_bounds = array<i64: 1, 32>}, {pipeline_mode = #tpu.pipeline_mode<synchronous>, transform_indices = @transform_3, window_bounds = array<i64: 32, 96>}, {pipeline_mode = #tpu.pipeline_mode<synchronous>, transform_indices = @transform_4, window_bounds = array<i64: 1, 96>}, {transform_indices = @transform_5, window_bounds = array<i64: 16, 96>}]} {
    %c0 = arith.constant 0 : index
    %c0_0 = arith.constant 0 : index
    %0 = vector.load %arg1[%c0, %c0_0] : memref<16x32xf32, #tpu.memory_space<vmem>>, vector<16x32xf32>
    %c0_1 = arith.constant 0 : index
    %c0_2 = arith.constant 0 : index
    %1 = vector.load %arg2[%c0_1, %c0_2] : memref<1x32xf32, #tpu.memory_space<vmem>>, vector<1x32xf32>
    %c0_3 = arith.constant 0 : index
    %c0_4 = arith.constant 0 : index
    %2 = vector.load %arg3[%c0_3, %c0_4] : memref<1x32xf32, #tpu.memory_space<vmem>>, vector<1x32xf32>
    %cst = arith.constant dense<0.000000e+00> : vector<16xf32>
    %3 = vector.multi_reduction <add>, %0, %cst [1] : vector<16x32xf32> to vector<16xf32>
    %4 = vector.shape_cast %3 : vector<16xf32> to vector<16x1xf32>
    %cst_5 = arith.constant 3.200000e+01 : f32
    %5 = vector.broadcast %cst_5 : f32 to vector<16x1xf32>
    %6 = arith.divf %4, %5 : vector<16x1xf32>
    %7 = vector.broadcast %6 : vector<16x1xf32> to vector<16x32xf32>
    %8 = arith.subf %0, %7 : vector<16x32xf32>
    %9 = arith.mulf %8, %8 : vector<16x32xf32>
    %cst_6 = arith.constant dense<0.000000e+00> : vector<16xf32>
    %10 = vector.multi_reduction <add>, %9, %cst_6 [1] : vector<16x32xf32> to vector<16xf32>
    %11 = vector.shape_cast %10 : vector<16xf32> to vector<16x1xf32>
    %cst_7 = arith.constant 0.0322580636 : f32
    %12 = vector.broadcast %cst_7 : f32 to vector<16x1xf32>
    %13 = arith.mulf %11, %12 : vector<16x1xf32>
    %14 = math.sqrt %13 : vector<16x1xf32>
    %cst_8 = arith.constant 9.99999997E-7 : f32
    %15 = vector.broadcast %cst_8 : f32 to vector<16x1xf32>
    %16 = arith.addf %14, %15 : vector<16x1xf32>
    %17 = tpu.reciprocal %16 : vector<16x1xf32> -> vector<16x1xf32>
    %18 = vector.broadcast %6 : vector<16x1xf32> to vector<16x32xf32>
    %19 = arith.subf %0, %18 : vector<16x32xf32>
    %20 = vector.broadcast %17 : vector<16x1xf32> to vector<16x32xf32>
    %21 = arith.mulf %19, %20 : vector<16x32xf32>
    %22 = vector.broadcast %1 : vector<1x32xf32> to vector<16x32xf32>
    %23 = arith.mulf %22, %21 : vector<16x32xf32>
    %24 = vector.broadcast %2 : vector<1x32xf32> to vector<16x32xf32>
    %25 = arith.addf %23, %24 : vector<16x32xf32>
    %c0_9 = arith.constant 0 : index
    %c0_10 = arith.constant 0 : index
    %26 = vector.load %arg4[%c0_9, %c0_10] : memref<32x96xf32, #tpu.memory_space<vmem>>, vector<32x96xf32>
    %cst_11 = arith.constant dense<0.000000e+00> : vector<16x96xf32>
    %27 = tpu.matmul %25, %26, %cst_11 {dimension_numbers = #tpu.dot_dimension_numbers<[1], [0], [0], [1], [0, 0, 1, 1], [], []>} : vector<16x32xf32>, vector<32x96xf32>, vector<16x96xf32> -> vector<16x96xf32>
    %c0_12 = arith.constant 0 : index
    %c0_13 = arith.constant 0 : index
    %28 = vector.load %arg5[%c0_12, %c0_13] : memref<1x96xf32, #tpu.memory_space<vmem>>, vector<1x96xf32>
    %29 = vector.broadcast %28 : vector<1x96xf32> to vector<16x96xf32>
    %30 = arith.addf %27, %29 : vector<16x96xf32>
    %c0_14 = arith.constant 0 : index
    %c0_15 = arith.constant 0 : index
    %31 = vector.load %arg6[%c0_14, %c0_15] : memref<16x96xf32, #tpu.memory_space<vmem>>, vector<16x96xf32>
    tpu.vector_store %arg6[%c0_14, %c0_15], %30 {strides = array<i32>} : memref<16x96xf32, #tpu.memory_space<vmem>>, vector<16x96xf32>,
    return
  }
  func.func @transform_0(%arg0: i32) -> (i32, i32) {
    %c0_i32 = arith.constant 0 : i32
    %c0_i32_0 = arith.constant 0 : i32
    return %arg0, %c0_i32 : i32, i32
  }
  func.func @transform_1(%arg0: i32) -> (i32, i32) {
    %c0_i32 = arith.constant 0 : i32
    %c0_i32_0 = arith.constant 0 : i32
    %c0_i32_1 = arith.constant 0 : i32
    return %c0_i32, %c0_i32_0 : i32, i32
  }
  func.func @transform_2(%arg0: i32) -> (i32, i32) {
    %c0_i32 = arith.constant 0 : i32
    %c0_i32_0 = arith.constant 0 : i32
    %c0_i32_1 = arith.constant 0 : i32
    return %c0_i32, %c0_i32_0 : i32, i32
  }
  func.func @transform_3(%arg0: i32) -> (i32, i32) {
    %c0_i32 = arith.constant 0 : i32
    %c0_i32_0 = arith.constant 0 : i32
    %c0_i32_1 = arith.constant 0 : i32
    return %c0_i32, %c0_i32_0 : i32, i32
  }
  func.func @transform_4(%arg0: i32) -> (i32, i32) {
    %c0_i32 = arith.constant 0 : i32
    %c0_i32_0 = arith.constant 0 : i32
    %c0_i32_1 = arith.constant 0 : i32
    return %c0_i32, %c0_i32_0 : i32, i32
  }
  func.func @transform_5(%arg0: i32) -> (i32, i32) {
    %c0_i32 = arith.constant 0 : i32
    %c0_i32_0 = arith.constant 0 : i32
    return %arg0, %c0_i32 : i32, i32
  }
}

module attributes {stable_mosaic.version = 11 : i64} {
  func.func @ln_qkv_kernel(%arg0: i32, %arg1: memref<16x32xf32, #tpu.memory_space<vmem>>, %arg2: memref<1x32xf32, #tpu.memory_space<vmem>>, %arg3: memref<1x32xf32, #tpu.memory_space<vmem>>, %arg4: memref<32x96xf32, #tpu.memory_space<vmem>>, %arg5: memref<1x96xf32, #tpu.memory_space<vmem>>, %arg6: memref<16x96xf32, #tpu.memory_space<vmem>>) attributes {dimension_semantics = [#tpu.dimension_semantics<parallel>], iteration_bounds = array<i64: 1>, scalar_prefetch = 0 : i64, scratch_operands = 0 : i64, tpu.core_type = #tpu.core_type<tc>, window_params = [{transform_indices = @transform_0, window_bounds = array<i64: 16, 32>}, {pipeline_mode = #tpu.pipeline_mode<synchronous>, transform_indices = @transform_1, window_bounds = array<i64: 1, 32>}, {pipeline_mode = #tpu.pipeline_mode<synchronous>, transform_indices = @transform_2, window_bounds = array<i64: 1, 32>}, {pipeline_mode = #tpu.pipeline_mode<synchronous>, transform_indices = @transform_3, window_bounds = array<i64: 32, 96>}, {pipeline_mode = #tpu.pipeline_mode<synchronous>, transform_indices = @transform_4, window_bounds = array<i64: 1, 96>}, {transform_indices = @transform_5, window_bounds = array<i64: 16, 96>}]} {
    %c0 = arith.constant 0 : index
    %c0_0 = arith.constant 0 : index
    %0 = vector.load %arg1[%c0, %c0_0] : memref<16x32xf32, #tpu.memory_space<vmem>>, vector<16x32xf32>
    %c0_1 = arith.constant 0 : index
    %c0_2 = arith.constant 0 : index
    %1 = vector.load %arg2[%c0_1, %c0_2] : memref<1x32xf32, #tpu.memory_space<vmem>>, vector<1x32xf32>
    %c0_3 = arith.constant 0 : index
    %c0_4 = arith.constant 0 : index
    %2 = vector.load %arg3[%c0_3, %c0_4] : memref<1x32xf32, #tpu.memory_space<vmem>>, vector<1x32xf32>
    %cst = arith.constant dense<0.000000e+00> : vector<16xf32>
    %3 = vector.multi_reduction <add>, %0, %cst [1] : vector<16x32xf32> to vector<16xf32>
    %4 = vector.shape_cast %3 : vector<16xf32> to vector<16x1xf32>
    %cst_5 = arith.constant 3.200000e+01 : f32
    %5 = vector.broadcast %cst_5 : f32 to vector<16x1xf32>
    %6 = arith.divf %4, %5 : vector<16x1xf32>
    %7 = vector.broadcast %6 : vector<16x1xf32> to vector<16x32xf32>
    %8 = arith.subf %0, %7 : vector<16x32xf32>
    %9 = arith.mulf %8, %8 : vector<16x32xf32>
    %cst_6 = arith.constant dense<0.000000e+00> : vector<16xf32>
    %10 = vector.multi_reduction <add>, %9, %cst_6 [1] : vector<16x32xf32> to vector<16xf32>
    %11 = vector.shape_cast %10 : vector<16xf32> to vector<16x1xf32>
    %cst_7 = arith.constant 0.0322580636 : f32
    %12 = vector.broadcast %cst_7 : f32 to vector<16x1xf32>
    %13 = arith.mulf %11, %12 : vector<16x1xf32>
    %14 = math.sqrt %13 : vector<16x1xf32>
    %cst_8 = arith.constant 9.99999997E-7 : f32
    %15 = vector.broadcast %cst_8 : f32 to vector<16x1xf32>
    %16 = arith.addf %14, %15 : vector<16x1xf32>
    %17 = tpu.reciprocal %16 : vector<16x1xf32> -> vector<16x1xf32>
    %18 = vector.broadcast %6 : vector<16x1xf32> to vector<16x32xf32>
    %19 = arith.subf %0, %18 : vector<16x32xf32>
    %20 = vector.broadcast %17 : vector<16x1xf32> to vector<16x32xf32>
    %21 = arith.mulf %19, %20 : vector<16x32xf32>
    %22 = vector.broadcast %1 : vector<1x32xf32> to vector<16x32xf32>
    %23 = arith.mulf %22, %21 : vector<16x32xf32>
    %24 = vector.broadcast %2 : vector<1x32xf32> to vector<16x32xf32>
    %25 = arith.addf %23, %24 : vector<16x32xf32>
    %c0_9 = arith.constant 0 : index
    %c0_10 = arith.constant 0 : index
    %26 = vector.load %arg4[%c0_9, %c0_10] : memref<32x96xf32, #tpu.memory_space<vmem>>, vector<32x96xf32>
    %cst_11 = arith.constant dense<0.000000e+00> : vector<16x96xf32>
    %27 = tpu.matmul %25, %26, %cst_11 {dimension_numbers = #tpu.dot_dimension_numbers<[1], [0], [0], [1], [0, 0, 1, 1], [], []>} : vector<16x32xf32>, vector<32x96xf32>, vector<16x96xf32> -> vector<16x96xf32>
    %c0_12 = arith.constant 0 : index
    %c0_13 = arith.constant 0 : index
    %28 = vector.load %arg5[%c0_12, %c0_13] : memref<1x96xf32, #tpu.memory_space<vmem>>, vector<1x96xf32>
    %29 = vector.broadcast %28 : vector<1x96xf32> to vector<16x96xf32>
    %30 = arith.addf %27, %29 : vector<16x96xf32>
    %c0_14 = arith.constant 0 : index
    %c0_15 = arith.constant 0 : index
    %31 = vector.load %arg6[%c0_14, %c0_15] : memref<16x96xf32, #tpu.memory_space<vmem>>, vector<16x96xf32>
    tpu.vector_store %arg6[%c0_14, %c0_15], %30 {strides = array<i32>} : memref<16x96xf32, #tpu.memory_space<vmem>>, vector<16x96xf32>,
    return
  }
  func.func @transform_0(%arg0: i32) -> (i32, i32) {
    %c0_i32 = arith.constant 0 : i32
    %c0_i32_0 = arith.constant 0 : i32
    return %arg0, %c0_i32 : i32, i32
  }
  func.func @transform_1(%arg0: i32) -> (i32, i32) {
    %c0_i32 = arith.constant 0 : i32
    %c0_i32_0 = arith.constant 0 : i32
    %c0_i32_1 = arith.constant 0 : i32
    return %c0_i32, %c0_i32_0 : i32, i32
  }
  func.func @transform_2(%arg0: i32) -> (i32, i32) {
    %c0_i32 = arith.constant 0 : i32
    %c0_i32_0 = arith.constant 0 : i32
    %c0_i32_1 = arith.constant 0 : i32
    return %c0_i32, %c0_i32_0 : i32, i32
  }
  func.func @transform_3(%arg0: i32) -> (i32, i32) {
    %c0_i32 = arith.constant 0 : i32
    %c0_i32_0 = arith.constant 0 : i32
    %c0_i32_1 = arith.constant 0 : i32
    return %c0_i32, %c0_i32_0 : i32, i32
  }
  func.func @transform_4(%arg0: i32) -> (i32, i32) {
    %c0_i32 = arith.constant 0 : i32
    %c0_i32_0 = arith.constant 0 : i32
    %c0_i32_1 = arith.constant 0 : i32
    return %c0_i32, %c0_i32_0 : i32, i32
  }
  func.func @transform_5(%arg0: i32) -> (i32, i32) {
    %c0_i32 = arith.constant 0 : i32
    %c0_i32_0 = arith.constant 0 : i32
    return %arg0, %c0_i32 : i32, i32
  }
}

</mosaic_0001>

<llo_original>
// kernel: tpu_custom_call.1
$region0: #{tpu_custom_call.1}
  #allocation0 [shape = 'u32[]', space=smem, size = 0x4, offset = 0x4, fixed_abs, tag = 'smem constant byte address 0x4 - core index']
  #allocation1 [shape = 'u32[144,128]{1,0:T(1,128)}', space=vmem, size = 0x12000, scoped, tag = 'internal scratch']
  %s0 = inlined_call_operand.hbm [shape: f32[16,32], index: 0, kind: input, shape index: {}]
  %s1 = inlined_call_operand.vmem [shape: f32[1,32], index: 1, kind: input, shape index: {}]
  %s2 = inlined_call_operand.vmem [shape: f32[1,32], index: 2, kind: input, shape index: {}]
  %s3 = inlined_call_operand.hbm [shape: f32[32,96], index: 3, kind: input, shape index: {}]
  %s4 = inlined_call_operand.vmem [shape: f32[1,96], index: 4, kind: input, shape index: {}]
  %s5 = inlined_call_operand.hbm [shape: f32[16,96], index: 5, kind: output, shape index: {}]
  %s6 = sld [smem:[#allocation0]]
  $region38: #{tpu_custom_call.1} parent=0
    _
  %s8 = ssub.s32 1, %s6
  %s9 = scalar_select 0, %s8, %s6
  $region1: #{tpu_custom_call.1} parent=0
    #allocation2 [shape = 'u8[8192]{0}', space=vmem, size = 0x2000, scoped, tag = 'input window, operand 0, single buffered']
    #allocation3 [shape = 's32[1]{0}', space=sflag, size = 0x4, scoped, tag = 'scoped memory for tpu_custom_call.1']
    #allocation4 [shape = 's32[1]{0}', space=sflag, size = 0x4, scoped, tag = 'scoped memory for tpu_custom_call.1']
    #allocation5 [shape = 'u8[16384]{0}', space=vmem, size = 0x4000, scoped, tag = 'input window, operand 3, single buffered']
    #allocation6 [shape = 's32[1]{0}', space=sflag, size = 0x4, scoped, tag = 'scoped memory for tpu_custom_call.1']
    #allocation7 [shape = 'u8[8192]{0}', space=vmem, size = 0x2000, scoped, tag = 'output window, operand 0, single buffered']
    %10 = vsyncpa [#allocation3], 0
    %11 = vsyncpa [#allocation6], 0
    %12 = vsyncpa [#allocation4], 0
    // Predicated region
    $region2: #{tpu_custom_call.1} parent=1 // pred_check
      _
    $region3: #{tpu_custom_call.1} parent=1 // pred_check_branch
      %14 = sbr.rel (0) target = $region5
    $region4: #{tpu_custom_call.1} parent=1 // pred_region
      %s16 = ssub.s32 256, 256
      %17 = vsyncadd [#allocation3], %s16
      %s18 = sshll.u32 [#allocation2], 4
      %s19 = int_to_ptr.vmem [resolvable:$true] %s18
      %24 = dma.hbm_to_vmem [thread:$0]  %s0, 256, %s19, [#allocation3], 128, 128, 8
    $region5: #{tpu_custom_call.1} parent=1 // pred_fallthru
      _
    // Predicated region
    $region6: #{tpu_custom_call.1} parent=1 // pred_check
      _
    $region7: #{tpu_custom_call.1} parent=1 // pred_check_branch
      %26 = sbr.rel (0) target = $region9
    $region8: #{tpu_custom_call.1} parent=1 // pred_region
      _
    $region9: #{tpu_custom_call.1} parent=1 // pred_fallthru
      _
    // Predicated region
    $region10: #{tpu_custom_call.1} parent=1 // pred_check
      _
    $region11: #{tpu_custom_call.1} parent=1 // pred_check_branch
      %28 = sbr.rel (0) target = $region13
    $region12: #{tpu_custom_call.1} parent=1 // pred_region
      _
    $region13: #{tpu_custom_call.1} parent=1 // pred_fallthru
      _
    // Predicated region
    $region14: #{tpu_custom_call.1} parent=1 // pred_check
      _
    $region15: #{tpu_custom_call.1} parent=1 // pred_check_branch
      %30 = sbr.rel (0) target = $region17
    $region16: #{tpu_custom_call.1} parent=1 // pred_region
      %s32 = ssub.s32 512, 512
      %33 = vsyncadd [#allocation6], %s32
      %s34 = sshll.u32 [#allocation5], 4
      %s35 = int_to_ptr.vmem [resolvable:$true] %s34
      %40 = dma.hbm_to_vmem [thread:$0]  %s3, 512, %s35, [#allocation6], 128, 128, 8
    $region17: #{tpu_custom_call.1} parent=1 // pred_fallthru
      _
    // Predicated region
    $region18: #{tpu_custom_call.1} parent=1 // pred_check
      _
    $region19: #{tpu_custom_call.1} parent=1 // pred_check_branch
      %42 = sbr.rel (0) target = $region21
    $region20: #{tpu_custom_call.1} parent=1 // pred_region
      _
    $region21: #{tpu_custom_call.1} parent=1 // pred_fallthru
      _
    // Predicated region
    $region22: #{tpu_custom_call.1} parent=1 // pred_check
      _
    $region23: #{tpu_custom_call.1} parent=1 // pred_check_branch
      %44 = sbr.rel (0) target = $region25
    $region24: #{tpu_custom_call.1} parent=1 // pred_region
      %45 = dma.done [#allocation3], 256
    $region25: #{tpu_custom_call.1} parent=1 // pred_fallthru
      _
    // Predicated region
    $region26: #{tpu_custom_call.1} parent=1 // pred_check
      _
    $region27: #{tpu_custom_call.1} parent=1 // pred_check_branch
      %47 = sbr.rel (0) target = $region29
    $region28: #{tpu_custom_call.1} parent=1 // pred_region
      %48 = dma.done [#allocation6], 512
    $region29: #{tpu_custom_call.1} parent=1 // pred_fallthru
      _
    %v49 = vld [vmem:[#allocation2] sm:$0xff]
    %v50 = vld [vmem:[#allocation2 + $0x8] sm:$0xff]
    %v51 = vld [vmem:[%s1] sm:$0x1]
    %v52 = vld [vmem:[%s2] sm:$0x1]
    %vm53 = vcmask 261120
    %v54 = vsel %vm53, %v49, 0.0
    %55 = vadd.xlane.f32.xlu0 %v54
    %v56 = vpop.xlane.xlu0 %55
    %v57 = vsel %vm53, %v50, 0.0
    %58 = vadd.xlane.f32.xlu0 %v57
    %v59 = vpop.xlane.xlu0 %58
    %v60 = vrcp.pop 32.0
    %v61 = vmul.f32 %v56, %v60
    %v62 = vmul.f32 %v59, %v60
    %v63 = vsub.f32 %v49, %v61
    %v64 = vsub.f32 %v50, %v62
    %v65 = vmul.f32 %v63, %v63
    %v66 = vmul.f32 %v64, %v64
    %v67 = vsel %vm53, %v65, 0.0
    %68 = vadd.xlane.f32.xlu0 %v67
    %v69 = vpop.xlane.xlu0 %68
    %v70 = vsel %vm53, %v66, 0.0
    %71 = vadd.xlane.f32.xlu0 %v70
    %v72 = vpop.xlane.xlu0 %71
    %v73 = vmul.f32 %v69, 0.032258064
    %v74 = vmul.f32 %v72, 0.032258064
    %v75 = vrsqrt.pop %v73
    %v76 = vmul.f32 %v73, %v75
    %vm77 = vcmp.eq.f32.partialorder %v73, inf
    %v78 = vsel %vm77, %v73, %v76
    %vm79 = vcmp.eq.f32.partialorder %v73, 0.0
    %v80 = vand.u32 %v73, 2147483648
    %v81 = vsel %vm79, %v80, %v78
    %v82 = vrsqrt.pop %v74
    %v83 = vmul.f32 %v74, %v82
    %vm84 = vcmp.eq.f32.partialorder %v74, inf
    %v85 = vsel %vm84, %v74, %v83
    %vm86 = vcmp.eq.f32.partialorder %v74, 0.0
    %v87 = vand.u32 %v74, 2147483648
    %v88 = vsel %vm86, %v87, %v85
    %v89 = vadd.f32 %v81, 1e-06
    %v90 = vadd.f32 %v88, 1e-06
    %v91 = vrcp.pop %v89
    %v92 = vrcp.pop %v90
    %v93 = vmul.f32 %v63, %v91
    %v94 = vmul.f32 %v64, %v92
    %v96 = vlaneseq
    %v97 = vshrl.u32 %v96, 7
    %v98 = vsub.s32 0, %v97
    %v99 = vrot.slane %v51, %v98
    %v101 = vmul.f32 %v99, %v93
    %v102 = vmul.f32 %v99, %v94
    %v104 = vlaneseq
    %v105 = vshrl.u32 %v104, 7
    %v106 = vsub.s32 0, %v105
    %v107 = vrot.slane %v52, %v106
    %v109 = vadd.f32 %v101, %v107
    %v110 = vadd.f32 %v102, %v107
    %v111 = vld [vmem:[#allocation5] sm:$0xff]
    %v112 = vld [vmem:[#allocation5 + $0x8] sm:$0xff]
    %v113 = vld [vmem:[#allocation5 + $0x10] sm:$0xff]
    %v114 = vld [vmem:[#allocation5 + $0x18] sm:$0xff]
    %v115 = vld [vmem:[%s4] sm:$0x1]
    %v117 = vlaneseq
    %v118 = vshrl.u32 %v117, 7
    %v119 = vsub.s32 0, %v118
    %v120 = vrot.slane %v115, %v119
    %v123 = vsel %vm53, %v109, 0
    %v126 = vsel %vm53, %v110, 0
    %128 = vmatprep.subr.mxu0 0.0
    %129 = vmatpush1.msra.mxu0 %v111
    %130 = vmatprep.subr.mxu0 0.0
    %131 = vmatpush1.msra.mxu0 %v112
    %132 = vmatprep.subr.mxu0 0.0
    %133 = vmatpush1.msra.mxu0 %v113
    %134 = vmatprep.subr.mxu0 0.0
    %135 = vmatpush1.msra.mxu0 %v114
    %136 = vmatprep.subr.mxu0 0.0
    %137 = vmatpush1.msra.mxu0 0.0
    %138 = vmatprep.subr.mxu0 0.0
    %139 = vmatpush1.msra.mxu0 0.0
    %140 = vmatprep.subr.mxu0 0.0
    %141 = vmatpush1.msra.mxu0 0.0
    %142 = vmatprep.subr.mxu0 0.0
    %143 = vmatpush1.msra.mxu0 0.0
    %144 = vmatprep.subr.mxu0 0.0
    %145 = vmatpush1.msra.mxu0 0.0
    %146 = vmatprep.subr.mxu0 0.0
    %147 = vmatpush1.msra.mxu0 0.0
    %148 = vmatprep.subr.mxu0 0.0
    %149 = vmatpush1.msra.mxu0 0.0
    %150 = vmatprep.subr.mxu0 0.0
    %151 = vmatpush1.msra.mxu0 0.0
    %152 = vmatprep.subr.mxu0 0.0
    %153 = vmatpush1.msra.mxu0 0.0
    %154 = vmatprep.subr.mxu0 0.0
    %155 = vmatpush1.msra.mxu0 0.0
    %156 = vmatprep.subr.mxu0 0.0
    %157 = vmatpush1.msra.mxu0 0.0
    %158 = vmatprep.subr.mxu0 0.0
    %159 = vmatpush1.msra.mxu0 0.0
    %160 = vmatprep.subr.mxu0 0.0
    %161 = vmatpush1.msra.mxu0 0.0
    %162 = vmatprep.subr.mxu0 0.0
    %163 = vmatpush1.msra.mxu0 0.0
    %164 = vmatprep.subr.mxu0 0.0
    %165 = vmatpush1.msra.mxu0 0.0
    %166 = vmatprep.subr.mxu0 0.0
    %167 = vmatpush1.msra.mxu0 0.0
    %168 = vmatprep.subr.mxu0 0.0
    %169 = vmatpush1.msra.mxu0 0.0
    %170 = vmatprep.subr.mxu0 0.0
    %171 = vmatpush1.msra.mxu0 0.0
    %172 = vmatprep.subr.mxu0 0.0
    %173 = vmatpush1.msra.mxu0 0.0
    %174 = vmatprep.subr.mxu0 0.0
    %175 = vmatpush1.msra.mxu0 0.0
    %176 = vmatprep.subr.mxu0 0.0
    %177 = vmatpush1.msra.mxu0 0.0
    %178 = vmatprep.subr.mxu0 0.0
    %179 = vmatpush1.msra.mxu0 0.0
    %180 = vmatprep.subr.mxu0 0.0
    %181 = vmatpush1.msra.mxu0 0.0
    %182 = vmatprep.subr.mxu0 0.0
    %183 = vmatpush1.msra.mxu0 0.0
    %184 = vmatprep.subr.mxu0 0.0
    %185 = vmatpush1.msra.mxu0 0.0
    %186 = vmatprep.subr.mxu0 0.0
    %187 = vmatpush1.msra.mxu0 0.0
    %188 = vmatprep.subr.mxu0 0.0
    %189 = vmatpush1.msra.mxu0 0.0
    %190 = vmatprep.subr.mxu0 0.0
    %191 = vmatpush1.msra.mxu0 0.0
    %192 = vmatprep.mubr.f32.mxu0 0.0
    %193 = vmatmul.mubr.f32.gmra.mrb[0].mxu0 %v123
    %v194 = vpop.f32.mrb[0].mxu0
    %v195 = vadd.f32 %v120, %v194
    %v196 = vpop.f32.mrb[0].mxu0
    %197 = vmatprep.mubr.f32.mxu0 0.0
    %198 = vmatmul.mubr.f32.gmra.mrb[0].mxu0 %v126
    %v199 = vpop.f32.mrb[0].mxu0
    %v200 = vadd.f32 %v120, %v199
    %v201 = vpop.f32.mrb[0].mxu0
    %202 = vdwg.mxu0
    %vm203 = vcmask 785408
    %204 = vst.msk [vmem:[#allocation7] sm:$0xff] %vm203, %v195
    %205 = vst.msk [vmem:[#allocation7 + $0x8] sm:$0xff] %vm203, %v200
    // Predicated region
    $region30: #{tpu_custom_call.1} parent=1 // pred_check
      _
    $region31: #{tpu_custom_call.1} parent=1 // pred_check_branch
      %207 = sbr.rel (0) target = $region33
    $region32: #{tpu_custom_call.1} parent=1 // pred_region
      %s209 = ssub.s32 256, 256
      %210 = vsyncadd [#allocation4], %s209
      %s211 = sshll.u32 [#allocation7], 4
      %s212 = int_to_ptr.vmem [resolvable:$true] %s211
      %217 = dma.vmem_to_hbm [thread:$0]  %s212, 256, %s5, [#allocation4], 128, 128, 8
    $region33: #{tpu_custom_call.1} parent=1 // pred_fallthru
      _
    // Predicated region
    $region34: #{tpu_custom_call.1} parent=1 // pred_check
      _
    $region35: #{tpu_custom_call.1} parent=1 // pred_check_branch
      %219 = sbr.rel (0) target = $region37
    $region36: #{tpu_custom_call.1} parent=1 // pred_region
      %220 = dma.done [#allocation4], 256
    $region37: #{tpu_custom_call.1} parent=1 // pred_fallthru
      _
    %221 = vsyncpa [#allocation3], 1
    %222 = vsyncpa [#allocation6], 1
    %223 = vsyncpa [#allocation4], 1

// kernel: tpu_custom_call.1
$region0: #{tpu_custom_call.1}
  #allocation0 [shape = 'u32[]', space=smem, size = 0x4, offset = 0x4, fixed_abs, tag = 'smem constant byte address 0x4 - core index']
  #allocation1 [shape = 'u32[144,128]{1,0:T(1,128)}', space=vmem, size = 0x12000, scoped, tag = 'internal scratch']
  %s0 = inlined_call_operand.hbm [shape: f32[16,32], index: 0, kind: input, shape index: {}]
  %s1 = inlined_call_operand.vmem [shape: f32[1,32], index: 1, kind: input, shape index: {}]
  %s2 = inlined_call_operand.vmem [shape: f32[1,32], index: 2, kind: input, shape index: {}]
  %s3 = inlined_call_operand.hbm [shape: f32[32,96], index: 3, kind: input, shape index: {}]
  %s4 = inlined_call_operand.vmem [shape: f32[1,96], index: 4, kind: input, shape index: {}]
  %s5 = inlined_call_operand.hbm [shape: f32[16,96], index: 5, kind: output, shape index: {}]
  %s6 = sld [smem:[#allocation0]]
  $region38: #{tpu_custom_call.1} parent=0
    _
  %s8 = ssub.s32 1, %s6
  %s9 = scalar_select 0, %s8, %s6
  $region1: #{tpu_custom_call.1} parent=0
    #allocation2 [shape = 'u8[8192]{0}', space=vmem, size = 0x2000, scoped, tag = 'input window, operand 0, single buffered']
    #allocation3 [shape = 's32[1]{0}', space=sflag, size = 0x4, scoped, tag = 'scoped memory for tpu_custom_call.1']
    #allocation4 [shape = 's32[1]{0}', space=sflag, size = 0x4, scoped, tag = 'scoped memory for tpu_custom_call.1']
    #allocation5 [shape = 'u8[16384]{0}', space=vmem, size = 0x4000, scoped, tag = 'input window, operand 3, single buffered']
    #allocation6 [shape = 's32[1]{0}', space=sflag, size = 0x4, scoped, tag = 'scoped memory for tpu_custom_call.1']
    #allocation7 [shape = 'u8[8192]{0}', space=vmem, size = 0x2000, scoped, tag = 'output window, operand 0, single buffered']
    %10 = vsyncpa [#allocation3], 0
    %11 = vsyncpa [#allocation6], 0
    %12 = vsyncpa [#allocation4], 0
    // Predicated region
    $region2: #{tpu_custom_call.1} parent=1 // pred_check
      _
    $region3: #{tpu_custom_call.1} parent=1 // pred_check_branch
      %14 = sbr.rel (0) target = $region5
    $region4: #{tpu_custom_call.1} parent=1 // pred_region
      %s16 = ssub.s32 256, 256
      %17 = vsyncadd [#allocation3], %s16
      %s18 = sshll.u32 [#allocation2], 4
      %s19 = int_to_ptr.vmem [resolvable:$true] %s18
      %24 = dma.hbm_to_vmem [thread:$0]  %s0, 256, %s19, [#allocation3], 128, 128, 8
    $region5: #{tpu_custom_call.1} parent=1 // pred_fallthru
      _
    // Predicated region
    $region6: #{tpu_custom_call.1} parent=1 // pred_check
      _
    $region7: #{tpu_custom_call.1} parent=1 // pred_check_branch
      %26 = sbr.rel (0) target = $region9
    $region8: #{tpu_custom_call.1} parent=1 // pred_region
      _
    $region9: #{tpu_custom_call.1} parent=1 // pred_fallthru
      _
    // Predicated region
    $region10: #{tpu_custom_call.1} parent=1 // pred_check
      _
    $region11: #{tpu_custom_call.1} parent=1 // pred_check_branch
      %28 = sbr.rel (0) target = $region13
    $region12: #{tpu_custom_call.1} parent=1 // pred_region
      _
    $region13: #{tpu_custom_call.1} parent=1 // pred_fallthru
      _
    // Predicated region
    $region14: #{tpu_custom_call.1} parent=1 // pred_check
      _
    $region15: #{tpu_custom_call.1} parent=1 // pred_check_branch
      %30 = sbr.rel (0) target = $region17
    $region16: #{tpu_custom_call.1} parent=1 // pred_region
      %s32 = ssub.s32 512, 512
      %33 = vsyncadd [#allocation6], %s32
      %s34 = sshll.u32 [#allocation5], 4
      %s35 = int_to_ptr.vmem [resolvable:$true] %s34
      %40 = dma.hbm_to_vmem [thread:$0]  %s3, 512, %s35, [#allocation6], 128, 128, 8
    $region17: #{tpu_custom_call.1} parent=1 // pred_fallthru
      _
    // Predicated region
    $region18: #{tpu_custom_call.1} parent=1 // pred_check
      _
    $region19: #{tpu_custom_call.1} parent=1 // pred_check_branch
      %42 = sbr.rel (0) target = $region21
    $region20: #{tpu_custom_call.1} parent=1 // pred_region
      _
    $region21: #{tpu_custom_call.1} parent=1 // pred_fallthru
      _
    // Predicated region
    $region22: #{tpu_custom_call.1} parent=1 // pred_check
      _
    $region23: #{tpu_custom_call.1} parent=1 // pred_check_branch
      %44 = sbr.rel (0) target = $region25
    $region24: #{tpu_custom_call.1} parent=1 // pred_region
      %45 = dma.done [#allocation3], 256
    $region25: #{tpu_custom_call.1} parent=1 // pred_fallthru
      _
    // Predicated region
    $region26: #{tpu_custom_call.1} parent=1 // pred_check
      _
    $region27: #{tpu_custom_call.1} parent=1 // pred_check_branch
      %47 = sbr.rel (0) target = $region29
    $region28: #{tpu_custom_call.1} parent=1 // pred_region
      %48 = dma.done [#allocation6], 512
    $region29: #{tpu_custom_call.1} parent=1 // pred_fallthru
      _
    %v49 = vld [vmem:[#allocation2] sm:$0xff]
    %v50 = vld [vmem:[#allocation2 + $0x8] sm:$0xff]
    %v51 = vld [vmem:[%s1] sm:$0x1]
    %v52 = vld [vmem:[%s2] sm:$0x1]
    %vm53 = vcmask 261120
    %v54 = vsel %vm53, %v49, 0.0
    %55 = vadd.xlane.f32.xlu0 %v54
    %v56 = vpop.xlane.xlu0 %55
    %v57 = vsel %vm53, %v50, 0.0
    %58 = vadd.xlane.f32.xlu0 %v57
    %v59 = vpop.xlane.xlu0 %58
    %v60 = vrcp.pop 32.0
    %v61 = vmul.f32 %v56, %v60
    %v62 = vmul.f32 %v59, %v60
    %v63 = vsub.f32 %v49, %v61
    %v64 = vsub.f32 %v50, %v62
    %v65 = vmul.f32 %v63, %v63
    %v66 = vmul.f32 %v64, %v64
    %v67 = vsel %vm53, %v65, 0.0
    %68 = vadd.xlane.f32.xlu0 %v67
    %v69 = vpop.xlane.xlu0 %68
    %v70 = vsel %vm53, %v66, 0.0
    %71 = vadd.xlane.f32.xlu0 %v70
    %v72 = vpop.xlane.xlu0 %71
    %v73 = vmul.f32 %v69, 0.032258064
    %v74 = vmul.f32 %v72, 0.032258064
    %v75 = vrsqrt.pop %v73
    %v76 = vmul.f32 %v73, %v75
    %vm77 = vcmp.eq.f32.partialorder %v73, inf
    %v78 = vsel %vm77, %v73, %v76
    %vm79 = vcmp.eq.f32.partialorder %v73, 0.0
    %v80 = vand.u32 %v73, 2147483648
    %v81 = vsel %vm79, %v80, %v78
    %v82 = vrsqrt.pop %v74
    %v83 = vmul.f32 %v74, %v82
    %vm84 = vcmp.eq.f32.partialorder %v74, inf
    %v85 = vsel %vm84, %v74, %v83
    %vm86 = vcmp.eq.f32.partialorder %v74, 0.0
    %v87 = vand.u32 %v74, 2147483648
    %v88 = vsel %vm86, %v87, %v85
    %v89 = vadd.f32 %v81, 1e-06
    %v90 = vadd.f32 %v88, 1e-06
    %v91 = vrcp.pop %v89
    %v92 = vrcp.pop %v90
    %v93 = vmul.f32 %v63, %v91
    %v94 = vmul.f32 %v64, %v92
    %v96 = vlaneseq
    %v97 = vshrl.u32 %v96, 7
    %v98 = vsub.s32 0, %v97
    %v99 = vrot.slane %v51, %v98
    %v101 = vmul.f32 %v99, %v93
    %v102 = vmul.f32 %v99, %v94
    %v104 = vlaneseq
    %v105 = vshrl.u32 %v104, 7
    %v106 = vsub.s32 0, %v105
    %v107 = vrot.slane %v52, %v106
    %v109 = vadd.f32 %v101, %v107
    %v110 = vadd.f32 %v102, %v107
    %v111 = vld [vmem:[#allocation5] sm:$0xff]
    %v112 = vld [vmem:[#allocation5 + $0x8] sm:$0xff]
    %v113 = vld [vmem:[#allocation5 + $0x10] sm:$0xff]
    %v114 = vld [vmem:[#allocation5 + $0x18] sm:$0xff]
    %v115 = vld [vmem:[%s4] sm:$0x1]
    %v117 = vlaneseq
    %v118 = vshrl.u32 %v117, 7
    %v119 = vsub.s32 0, %v118
    %v120 = vrot.slane %v115, %v119
    %v123 = vsel %vm53, %v109, 0
    %v126 = vsel %vm53, %v110, 0
    %128 = vmatprep.subr.mxu0 0.0
    %129 = vmatpush1.msra.mxu0 %v111
    %130 = vmatprep.subr.mxu0 0.0
    %131 = vmatpush1.msra.mxu0 %v112
    %132 = vmatprep.subr.mxu0 0.0
    %133 = vmatpush1.msra.mxu0 %v113
    %134 = vmatprep.subr.mxu0 0.0
    %135 = vmatpush1.msra.mxu0 %v114
    %136 = vmatprep.subr.mxu0 0.0
    %137 = vmatpush1.msra.mxu0 0.0
    %138 = vmatprep.subr.mxu0 0.0
    %139 = vmatpush1.msra.mxu0 0.0
    %140 = vmatprep.subr.mxu0 0.0
    %141 = vmatpush1.msra.mxu0 0.0
    %142 = vmatprep.subr.mxu0 0.0
    %143 = vmatpush1.msra.mxu0 0.0
    %144 = vmatprep.subr.mxu0 0.0
    %145 = vmatpush1.msra.mxu0 0.0
    %146 = vmatprep.subr.mxu0 0.0
    %147 = vmatpush1.msra.mxu0 0.0
    %148 = vmatprep.subr.mxu0 0.0
    %149 = vmatpush1.msra.mxu0 0.0
    %150 = vmatprep.subr.mxu0 0.0
    %151 = vmatpush1.msra.mxu0 0.0
    %152 = vmatprep.subr.mxu0 0.0
    %153 = vmatpush1.msra.mxu0 0.0
    %154 = vmatprep.subr.mxu0 0.0
    %155 = vmatpush1.msra.mxu0 0.0
    %156 = vmatprep.subr.mxu0 0.0
    %157 = vmatpush1.msra.mxu0 0.0
    %158 = vmatprep.subr.mxu0 0.0
    %159 = vmatpush1.msra.mxu0 0.0
    %160 = vmatprep.subr.mxu0 0.0
    %161 = vmatpush1.msra.mxu0 0.0
    %162 = vmatprep.subr.mxu0 0.0
    %163 = vmatpush1.msra.mxu0 0.0
    %164 = vmatprep.subr.mxu0 0.0
    %165 = vmatpush1.msra.mxu0 0.0
    %166 = vmatprep.subr.mxu0 0.0
    %167 = vmatpush1.msra.mxu0 0.0
    %168 = vmatprep.subr.mxu0 0.0
    %169 = vmatpush1.msra.mxu0 0.0
    %170 = vmatprep.subr.mxu0 0.0
    %171 = vmatpush1.msra.mxu0 0.0
    %172 = vmatprep.subr.mxu0 0.0
    %173 = vmatpush1.msra.mxu0 0.0
    %174 = vmatprep.subr.mxu0 0.0
    %175 = vmatpush1.msra.mxu0 0.0
    %176 = vmatprep.subr.mxu0 0.0
    %177 = vmatpush1.msra.mxu0 0.0
    %178 = vmatprep.subr.mxu0 0.0
    %179 = vmatpush1.msra.mxu0 0.0
    %180 = vmatprep.subr.mxu0 0.0
    %181 = vmatpush1.msra.mxu0 0.0
    %182 = vmatprep.subr.mxu0 0.0
    %183 = vmatpush1.msra.mxu0 0.0
    %184 = vmatprep.subr.mxu0 0.0
    %185 = vmatpush1.msra.mxu0 0.0
    %186 = vmatprep.subr.mxu0 0.0
    %187 = vmatpush1.msra.mxu0 0.0
    %188 = vmatprep.subr.mxu0 0.0
    %189 = vmatpush1.msra.mxu0 0.0
    %190 = vmatprep.subr.mxu0 0.0
    %191 = vmatpush1.msra.mxu0 0.0
    %192 = vmatprep.mubr.f32.mxu0 0.0
    %193 = vmatmul.mubr.f32.gmra.mrb[0].mxu0 %v123
    %v194 = vpop.f32.mrb[0].mxu0
    %v195 = vadd.f32 %v120, %v194
    %v196 = vpop.f32.mrb[0].mxu0
    %197 = vmatprep.mubr.f32.mxu0 0.0
    %198 = vmatmul.mubr.f32.gmra.mrb[0].mxu0 %v126
    %v199 = vpop.f32.mrb[0].mxu0
    %v200 = vadd.f32 %v120, %v199
    %v201 = vpop.f32.mrb[0].mxu0
    %202 = vdwg.mxu0
    %vm203 = vcmask 785408
    %204 = vst.msk [vmem:[#allocation7] sm:$0xff] %vm203, %v195
    %205 = vst.msk [vmem:[#allocation7 + $0x8] sm:$0xff] %vm203, %v200
    // Predicated region
    $region30: #{tpu_custom_call.1} parent=1 // pred_check
      _
    $region31: #{tpu_custom_call.1} parent=1 // pred_check_branch
      %207 = sbr.rel (0) target = $region33
    $region32: #{tpu_custom_call.1} parent=1 // pred_region
      %s209 = ssub.s32 256, 256
      %210 = vsyncadd [#allocation4], %s209
      %s211 = sshll.u32 [#allocation7], 4
      %s212 = int_to_ptr.vmem [resolvable:$true] %s211
      %217 = dma.vmem_to_hbm [thread:$0]  %s212, 256, %s5, [#allocation4], 128, 128, 8
    $region33: #{tpu_custom_call.1} parent=1 // pred_fallthru
      _
    // Predicated region
    $region34: #{tpu_custom_call.1} parent=1 // pred_check
      _
    $region35: #{tpu_custom_call.1} parent=1 // pred_check_branch
      %219 = sbr.rel (0) target = $region37
    $region36: #{tpu_custom_call.1} parent=1 // pred_region
      %220 = dma.done [#allocation4], 256
    $region37: #{tpu_custom_call.1} parent=1 // pred_fallthru
      _
    %221 = vsyncpa [#allocation3], 1
    %222 = vsyncpa [#allocation6], 1
    %223 = vsyncpa [#allocation4], 1

</llo_original>
